<compile_context>
chip_gen: v7x
topology: tpu7x:2x2x1
jax: 0.10.0
libtpu: 0.0.40
codegen_flags: <defaults>
</compile_context>

<pallas_src>
import jax
import jax.numpy as jnp
from jax.experimental import pallas as pl
from jax.experimental.pallas import tpu as pltpu

# ----------------------------- config ---------------------------------------
INPUT_LEN = 32
HIDDEN_DIM = 32
LATENT_DIM = 16
NUM_SIM = 10
BATCH = 16

PAD_IN = 32    # padded feature width (sublane/K dim) shared by all layers
PAD_SIM = 16   # padded NUM_SIM rows for Linear4 output

# packed-slab row offsets (every segment starts on an 8-row sublane boundary)
_OFF_W1 = 0                  # (PAD_IN, PAD_IN)   W1 (out, in), zero-padded
_OFF_W2 = 32                 # (PAD_IN, PAD_IN)   W2, rows >= LATENT_DIM zero
_OFF_W3 = 64                 # (PAD_IN, PAD_IN)   W3, lanes >= LATENT_DIM zero
_OFF_W4 = 96                 # (PAD_SIM, PAD_IN)  W4*alphas, rows >= NUM_SIM zero
_OFF_B = 112                 # (PAD_IN, PAD_IN)   lane0=b1, lane1=b2, lane2=b3 (columns)
_SLAB_ROWS = 144


# ----------------------------- kernel ---------------------------------------
def simloss_kernel(xt_ref, latt_ref, p_ref, out_ref):
    xt = xt_ref[...]      # (PAD_IN, TB)  X^T, rows >= INPUT_LEN are zero
    latt = latt_ref[...]  # (PAD_IN, TB)  latent^T, rows >= LATENT_DIM are zero

    # static 8-aligned slices into the packed parameter slab
    w1t = p_ref[_OFF_W1:_OFF_W1 + PAD_IN, :]      # (32, 32)
    w2t = p_ref[_OFF_W2:_OFF_W2 + PAD_IN, :]      # (32, 32) rows >= LATENT_DIM zero
    w3t = p_ref[_OFF_W3:_OFF_W3 + PAD_IN, :]      # (32, 32) lanes >= LATENT_DIM zero
    w4t = p_ref[_OFF_W4:_OFF_W4 + PAD_SIM, :]     # (16, 32) alphas folded, rows >= NUM_SIM zero
    bias = p_ref[_OFF_B:_OFF_B + PAD_IN, :]       # (32, 32)
    b1c = bias[:, 0:1]                            # (32, 1)
    b2c = bias[:, 1:2]                            # (32, 1) rows >= LATENT_DIM zero
    b3c = bias[:, 2:3]                            # (32, 1)

    # phi: h1 = relu(W1 x + b1); x_latent^T = W2 h1 + b2  (rows >= LATENT_DIM are zero)
    h1 = jnp.maximum(jnp.dot(w1t, xt, preferred_element_type=jnp.float32) + b1c, 0.0)
    xl = jnp.dot(w2t, h1, preferred_element_type=jnp.float32) + b2c        # (32, TB)

    # phi_sim hidden layer on both branches (shared weights), subtract BEFORE Linear4
    hx = jnp.maximum(jnp.dot(w3t, xl, preferred_element_type=jnp.float32) + b3c, 0.0)
    hl = jnp.maximum(jnp.dot(w3t, latt, preferred_element_type=jnp.float32) + b3c, 0.0)
    dh = hx - hl                                                           # (32, TB)

    # Linear4 once: b4 cancels exactly; alphas pre-folded into w4t rows
    s = jnp.dot(w4t, dh, preferred_element_type=jnp.float32)               # (16, TB)

    # lane-dense loss row: sum of squares along sublanes (padded rows are zero)
    out_ref[...] = jnp.sum(s * s, axis=0, keepdims=True)                   # (1, TB)


# ----------------------------- wrapper ---------------------------------------
def pack_params(params):
    """Pack W1,W2,W3,(W4*alphas),b1,b2,b3 (transposed, zero-padded) into one
    (144, 32) f32 slab.  Correctness of the padded sum-of-squares relies on the
    asserted shapes and the zero padding below."""
    w1, b1, w2, b2, w3, b3, w4, b4, alphas = params
    del b4  # cancels exactly in (X_sim - latent_sim)

    # invariants the zero-padding correctness depends on
    assert w1.shape == (INPUT_LEN, HIDDEN_DIM)
    assert w2.shape == (HIDDEN_DIM, LATENT_DIM)
    assert w3.shape == (LATENT_DIM, HIDDEN_DIM)
    assert w4.shape == (HIDDEN_DIM, NUM_SIM)
    assert b1.shape == (1, HIDDEN_DIM)
    assert b2.shape == (1, LATENT_DIM)
    assert b3.shape == (1, HIDDEN_DIM)
    assert alphas.shape == (1, NUM_SIM)
    assert INPUT_LEN <= PAD_IN and HIDDEN_DIM <= PAD_IN and LATENT_DIM <= PAD_IN
    assert NUM_SIM <= PAD_SIM

    def pad2(a, rows, cols):
        return jnp.pad(a, ((0, rows - a.shape[0]), (0, cols - a.shape[1])))

    w1t = pad2(w1.T, PAD_IN, PAD_IN)                 # (out, in) layout for W @ x^T
    w2t = pad2(w2.T, PAD_IN, PAD_IN)
    w3t = pad2(w3.T, PAD_IN, PAD_IN)
    w4at = pad2((w4 * alphas).T, PAD_SIM, PAD_IN)    # fold alphas into output rows
    bias = jnp.concatenate([
        pad2(b1.T, PAD_IN, 1),                       # lane 0
        pad2(b2.T, PAD_IN, 1),                       # lane 1
        pad2(b3.T, PAD_IN, 1),                       # lane 2
        jnp.zeros((PAD_IN, PAD_IN - 3), jnp.float32),
    ], axis=1)

    slab = jnp.concatenate([w1t, w2t, w3t, w4at, bias], axis=0)
    assert slab.shape == (_SLAB_ROWS, PAD_IN)
    return slab


def _choose_tile_b(B):
    """Batch sits on lanes, so a tile must be a multiple of 128 lanes (or the
    whole batch).  Prefer >= 2 grid steps so the 'parallel' axis shards across
    both v7x TensorCores; cap tiles at 512 lanes."""
    if B % 128 == 0 and B >= 256:
        for t in (512, 384, 256, 128):
            if B % t == 0 and B // t >= 2:
                return t
    return B  # single tile (demo path: pure launch/DMA overhead)


def sim_loss(X, latent, params):
    B = X.shape[0]
    tile_b = _choose_tile_b(B)
    assert B % tile_b == 0
    nb = B // tile_b

    slab = pack_params(params)
    # feature-major inputs (batch on lanes), zero-padded to PAD_IN feature rows
    # TODO(synk): emit X/latent feature-major from the producer to avoid this extra HBM pass.
    xt = jnp.pad(X.T, ((0, PAD_IN - INPUT_LEN), (0, 0)))          # (32, B)
    latt = jnp.pad(latent.T, ((0, PAD_IN - LATENT_DIM), (0, 0)))  # (32, B)

    macs_per_row = (PAD_IN * PAD_IN        # Linear1
                    + PAD_IN * PAD_IN      # Linear2
                    + 2 * PAD_IN * PAD_IN  # Linear3 on both branches
                    + PAD_SIM * PAD_IN)    # Linear4 (after subtract fusion)
    cost = pl.CostEstimate(
        flops=2 * B * macs_per_row,
        transcendentals=0,
        bytes_accessed=4 * (B * (2 * PAD_IN + 1) + _SLAB_ROWS * PAD_IN),
    )

    out_row = pl.pallas_call(
        simloss_kernel,
        out_shape=jax.ShapeDtypeStruct((1, B), jnp.float32),       # lane-dense loss row
        grid=(nb,),
        in_specs=[
            pl.BlockSpec((PAD_IN, tile_b), lambda i: (0, i)),      # X^T (padded)
            pl.BlockSpec((PAD_IN, tile_b), lambda i: (0, i)),      # latent^T (padded)
            pl.BlockSpec((_SLAB_ROWS, PAD_IN), lambda i: (0, 0)),  # packed params
        ],
        out_specs=pl.BlockSpec((1, tile_b), lambda i: (0, i)),
        compiler_params=pltpu.CompilerParams(
            dimension_semantics=("parallel",)),
        cost_estimate=cost,
    )(xt, latt, slab)

    return out_row.reshape(B, 1)


# ----------------------------- params ----------------------------------------
def init_params(key):
    ks = jax.random.split(key, 8)
    # Stored as [in, out]; biases as [1, out] (pack_params transposes).
    w1 = jax.random.normal(ks[0], (INPUT_LEN, HIDDEN_DIM), jnp.float32) * 0.1
    b1 = jax.random.normal(ks[1], (1, HIDDEN_DIM), jnp.float32) * 0.01
    w2 = jax.random.normal(ks[2], (HIDDEN_DIM, LATENT_DIM), jnp.float32) * 0.1
    b2 = jax.random.normal(ks[3], (1, LATENT_DIM), jnp.float32) * 0.01
    w3 = jax.random.normal(ks[4], (LATENT_DIM, HIDDEN_DIM), jnp.float32) * 0.1
    b3 = jax.random.normal(ks[5], (1, HIDDEN_DIM), jnp.float32) * 0.01
    w4 = jax.random.normal(ks[6], (HIDDEN_DIM, NUM_SIM), jnp.float32) * 0.1
    b4 = jax.random.normal(ks[7], (1, NUM_SIM), jnp.float32) * 0.01
    alphas = jnp.ones((1, NUM_SIM), jnp.float32)  # nn.Parameter(torch.ones(num_sim))
    return (w1, b1, w2, b2, w3, b3, w4, b4, alphas)


def sim_loss_ref(X, latent, params):
    """Pure-JAX reference matching the PyTorch module (with b4 and alphas)."""
    w1, b1, w2, b2, w3, b3, w4, b4, alphas = params
    x_latent = jnp.maximum(X @ w1 + b1, 0.0) @ w2 + b2
    phi_sim = lambda z: jnp.maximum(z @ w3 + b3, 0.0) @ w4 + b4
    dis = (phi_sim(x_latent) - phi_sim(latent)) * alphas
    return jnp.sum(dis * dis, axis=-1, keepdims=True)


# ----------------------------- main -------------------------------------------
if __name__ == "__main__":
    key = jax.random.PRNGKey(0)
    kx, klat, kp = jax.random.split(key, 3)

    X = jax.random.normal(kx, (BATCH, INPUT_LEN), jnp.float32)
    latent = jax.random.normal(klat, (BATCH, LATENT_DIM), jnp.float32)
    params = init_params(kp)

    out = sim_loss(X, latent, params)
    out = jax.block_until_ready(out)

    ref = sim_loss_ref(X, latent, params)
    assert out.shape == (BATCH, 1)
    assert jnp.allclose(out, ref, atol=1e-4, rtol=1e-4), (out, ref)

    print("KERNEL_OK")
</pallas_src>

<mosaic_0001>
module attributes {stable_mosaic.version = 11 : i64} {
  func.func @simloss_kernel(%arg0: i32, %arg1: memref<32x16xf32, #tpu.memory_space<vmem>>, %arg2: memref<32x16xf32, #tpu.memory_space<vmem>>, %arg3: memref<144x32xf32, #tpu.memory_space<vmem>>, %arg4: memref<1x16xf32, #tpu.memory_space<vmem>>) attributes {dimension_semantics = [#tpu.dimension_semantics<parallel>], iteration_bounds = array<i64: 1>, scalar_prefetch = 0 : i64, scratch_operands = 0 : i64, tpu.core_type = #tpu.core_type<tc>, window_params = [{transform_indices = @transform_0, window_bounds = array<i64: 32, 16>}, {transform_indices = @transform_1, window_bounds = array<i64: 32, 16>}, {pipeline_mode = #tpu.pipeline_mode<synchronous>, transform_indices = @transform_2, window_bounds = array<i64: 144, 32>}, {transform_indices = @transform_3, window_bounds = array<i64: 1, 16>}]} {
    %c0 = arith.constant 0 : index
    %c0_0 = arith.constant 0 : index
    %0 = vector.load %arg1[%c0, %c0_0] : memref<32x16xf32, #tpu.memory_space<vmem>>, vector<32x16xf32>
    %c0_1 = arith.constant 0 : index
    %c0_2 = arith.constant 0 : index
    %1 = vector.load %arg2[%c0_1, %c0_2] : memref<32x16xf32, #tpu.memory_space<vmem>>, vector<32x16xf32>
    %c0_3 = arith.constant 0 : index
    %c0_4 = arith.constant 0 : index
    %2 = vector.load %arg3[%c0_3, %c0_4] : memref<144x32xf32, #tpu.memory_space<vmem>>, vector<32x32xf32>
    %c32 = arith.constant 32 : index
    %c0_5 = arith.constant 0 : index
    %3 = vector.load %arg3[%c32, %c0_5] : memref<144x32xf32, #tpu.memory_space<vmem>>, vector<32x32xf32>
    %c64 = arith.constant 64 : index
    %c0_6 = arith.constant 0 : index
    %4 = vector.load %arg3[%c64, %c0_6] : memref<144x32xf32, #tpu.memory_space<vmem>>, vector<32x32xf32>
    %c96 = arith.constant 96 : index
    %c0_7 = arith.constant 0 : index
    %5 = vector.load %arg3[%c96, %c0_7] : memref<144x32xf32, #tpu.memory_space<vmem>>, vector<16x32xf32>
    %c112 = arith.constant 112 : index
    %c0_8 = arith.constant 0 : index
    %6 = vector.load %arg3[%c112, %c0_8] : memref<144x32xf32, #tpu.memory_space<vmem>>, vector<32x32xf32>
    %7 = vector.extract_strided_slice %6 {offsets = [0, 0], sizes = [32, 1], strides = [1, 1]} : vector<32x32xf32> to vector<32x1xf32>
    %8 = vector.extract_strided_slice %6 {offsets = [0, 1], sizes = [32, 1], strides = [1, 1]} : vector<32x32xf32> to vector<32x1xf32>
    %9 = vector.extract_strided_slice %6 {offsets = [0, 2], sizes = [32, 1], strides = [1, 1]} : vector<32x32xf32> to vector<32x1xf32>
    %cst = arith.constant dense<0.000000e+00> : vector<32x16xf32>
    %10 = tpu.matmul %2, %0, %cst {dimension_numbers = #tpu.dot_dimension_numbers<[1], [0], [0], [1], [0, 0, 1, 1], [], []>} : vector<32x32xf32>, vector<32x16xf32>, vector<32x16xf32> -> vector<32x16xf32>
    %11 = vector.broadcast %7 : vector<32x1xf32> to vector<32x16xf32>
    %12 = arith.addf %10, %11 : vector<32x16xf32>
    %cst_9 = arith.constant 0.000000e+00 : f32
    %13 = vector.broadcast %cst_9 : f32 to vector<32x16xf32>
    %14 = arith.maximumf %12, %13 : vector<32x16xf32>
    %cst_10 = arith.constant dense<0.000000e+00> : vector<32x16xf32>
    %15 = tpu.matmul %3, %14, %cst_10 {dimension_numbers = #tpu.dot_dimension_numbers<[1], [0], [0], [1], [0, 0, 1, 1], [], []>} : vector<32x32xf32>, vector<32x16xf32>, vector<32x16xf32> -> vector<32x16xf32>
    %16 = vector.broadcast %8 : vector<32x1xf32> to vector<32x16xf32>
    %17 = arith.addf %15, %16 : vector<32x16xf32>
    %cst_11 = arith.constant dense<0.000000e+00> : vector<32x16xf32>
    %18 = tpu.matmul %4, %17, %cst_11 {dimension_numbers = #tpu.dot_dimension_numbers<[1], [0], [0], [1], [0, 0, 1, 1], [], []>} : vector<32x32xf32>, vector<32x16xf32>, vector<32x16xf32> -> vector<32x16xf32>
    %19 = vector.broadcast %9 : vector<32x1xf32> to vector<32x16xf32>
    %20 = arith.addf %18, %19 : vector<32x16xf32>
    %cst_12 = arith.constant 0.000000e+00 : f32
    %21 = vector.broadcast %cst_12 : f32 to vector<32x16xf32>
    %22 = arith.maximumf %20, %21 : vector<32x16xf32>
    %cst_13 = arith.constant dense<0.000000e+00> : vector<32x16xf32>
    %23 = tpu.matmul %4, %1, %cst_13 {dimension_numbers = #tpu.dot_dimension_numbers<[1], [0], [0], [1], [0, 0, 1, 1], [], []>} : vector<32x32xf32>, vector<32x16xf32>, vector<32x16xf32> -> vector<32x16xf32>
    %24 = vector.broadcast %9 : vector<32x1xf32> to vector<32x16xf32>
    %25 = arith.addf %23, %24 : vector<32x16xf32>
    %cst_14 = arith.constant 0.000000e+00 : f32
    %26 = vector.broadcast %cst_14 : f32 to vector<32x16xf32>
    %27 = arith.maximumf %25, %26 : vector<32x16xf32>
    %28 = arith.subf %22, %27 : vector<32x16xf32>
    %cst_15 = arith.constant dense<0.000000e+00> : vector<16x16xf32>
    %29 = tpu.matmul %5, %28, %cst_15 {dimension_numbers = #tpu.dot_dimension_numbers<[1], [0], [0], [1], [0, 0, 1, 1], [], []>} : vector<16x32xf32>, vector<32x16xf32>, vector<16x16xf32> -> vector<16x16xf32>
    %30 = arith.mulf %29, %29 : vector<16x16xf32>
    %cst_16 = arith.constant dense<0.000000e+00> : vector<16xf32>
    %31 = vector.multi_reduction <add>, %30, %cst_16 [0] : vector<16x16xf32> to vector<16xf32>
    %32 = vector.shape_cast %31 : vector<16xf32> to vector<1x16xf32>
    %c0_17 = arith.constant 0 : index
    %c0_18 = arith.constant 0 : index
    %33 = vector.load %arg4[%c0_17, %c0_18] : memref<1x16xf32, #tpu.memory_space<vmem>>, vector<1x16xf32>
    tpu.vector_store %arg4[%c0_17, %c0_18], %32 {strides = array<i32>} : memref<1x16xf32, #tpu.memory_space<vmem>>, vector<1x16xf32>,
    return
  }
  func.func @transform_0(%arg0: i32) -> (i32, i32) {
    %c0_i32 = arith.constant 0 : i32
    %c0_i32_0 = arith.constant 0 : i32
    return %c0_i32, %arg0 : i32, i32
  }
  func.func @transform_1(%arg0: i32) -> (i32, i32) {
    %c0_i32 = arith.constant 0 : i32
    %c0_i32_0 = arith.constant 0 : i32
    return %c0_i32, %arg0 : i32, i32
  }
  func.func @transform_2(%arg0: i32) -> (i32, i32) {
    %c0_i32 = arith.constant 0 : i32
    %c0_i32_0 = arith.constant 0 : i32
    %c0_i32_1 = arith.constant 0 : i32
    return %c0_i32, %c0_i32_0 : i32, i32
  }
  func.func @transform_3(%arg0: i32) -> (i32, i32) {
    %c0_i32 = arith.constant 0 : i32
    %c0_i32_0 = arith.constant 0 : i32
    return %c0_i32, %arg0 : i32, i32
  }
}

</mosaic_0001>

<llo_original>
// kernel: tpu_custom_call.1
$region0: #{tpu_custom_call.1}
  #allocation0 [shape = 'u32[]', space=smem, size = 0x4, offset = 0x4, fixed_abs, tag = 'smem constant byte address 0x4 - core index']
  #allocation1 [shape = 'u32[144,128]{1,0:T(1,128)}', space=vmem, size = 0x12000, scoped, tag = 'internal scratch']
  %s0 = inlined_call_operand.vmem [shape: f32[32,16], index: 0, kind: input, shape index: {}]
  %s1 = inlined_call_operand.vmem [shape: f32[32,16], index: 1, kind: input, shape index: {}]
  %s2 = inlined_call_operand.vmem [shape: f32[144,32], index: 2, kind: input, shape index: {}]
  %s3 = inlined_call_operand.hbm [shape: f32[1,16], index: 3, kind: output, shape index: {}]
  %s4 = sld [smem:[#allocation0]]
  $region22: #{tpu_custom_call.1} parent=0
    _
  %s6 = ssub.s32 1, %s4
  %s7 = scalar_select 0, %s6, %s4
  $region1: #{tpu_custom_call.1} parent=0
    #allocation2 [shape = 'u8[512]{0}', space=vmem, size = 0x400, scoped, tag = 'output window, operand 0, single buffered']
    #allocation3 [shape = 's32[1]{0}', space=sflag, size = 0x4, scoped, tag = 'scoped memory for tpu_custom_call.1']
    %8 = vsyncpa [#allocation3], 0
    // Predicated region
    $region2: #{tpu_custom_call.1} parent=1 // pred_check
      _
    $region3: #{tpu_custom_call.1} parent=1 // pred_check_branch
      %10 = sbr.rel (0) target = $region5
    $region4: #{tpu_custom_call.1} parent=1 // pred_region
      _
    $region5: #{tpu_custom_call.1} parent=1 // pred_fallthru
      _
    // Predicated region
    $region6: #{tpu_custom_call.1} parent=1 // pred_check
      _
    $region7: #{tpu_custom_call.1} parent=1 // pred_check_branch
      %12 = sbr.rel (0) target = $region9
    $region8: #{tpu_custom_call.1} parent=1 // pred_region
      _
    $region9: #{tpu_custom_call.1} parent=1 // pred_fallthru
      _
    // Predicated region
    $region10: #{tpu_custom_call.1} parent=1 // pred_check
      _
    $region11: #{tpu_custom_call.1} parent=1 // pred_check_branch
      %14 = sbr.rel (0) target = $region13
    $region12: #{tpu_custom_call.1} parent=1 // pred_region
      _
    $region13: #{tpu_custom_call.1} parent=1 // pred_fallthru
      _
    %v15 = vld [vmem:[%s0] sm:$0xff]
    %v16 = vld [vmem:[%s0 + $0x8] sm:$0xff]
    %v17 = vld [vmem:[%s0 + $0x10] sm:$0xff]
    %v18 = vld [vmem:[%s0 + $0x18] sm:$0xff]
    %v19 = vld [vmem:[%s1] sm:$0xff]
    %v20 = vld [vmem:[%s1 + $0x8] sm:$0xff]
    %v21 = vld [vmem:[%s1 + $0x10] sm:$0xff]
    %v22 = vld [vmem:[%s1 + $0x18] sm:$0xff]
    %v23 = vld [vmem:[%s2] sm:$0xff]
    %v24 = vld [vmem:[%s2 + $0x8] sm:$0xff]
    %v25 = vld [vmem:[%s2 + $0x10] sm:$0xff]
    %v26 = vld [vmem:[%s2 + $0x18] sm:$0xff]
    %v27 = vld [vmem:[%s2 + $0x20] sm:$0xff]
    %v28 = vld [vmem:[%s2 + $0x28] sm:$0xff]
    %v29 = vld [vmem:[%s2 + $0x30] sm:$0xff]
    %v30 = vld [vmem:[%s2 + $0x38] sm:$0xff]
    %v31 = vld [vmem:[%s2 + $0x40] sm:$0xff]
    %v32 = vld [vmem:[%s2 + $0x48] sm:$0xff]
    %v33 = vld [vmem:[%s2 + $0x50] sm:$0xff]
    %v34 = vld [vmem:[%s2 + $0x58] sm:$0xff]
    %v35 = vld [vmem:[%s2 + $0x60] sm:$0xff]
    %v36 = vld [vmem:[%s2 + $0x68] sm:$0xff]
    %v37 = vld [vmem:[%s2 + $0x70] sm:$0xff]
    %v38 = vld [vmem:[%s2 + $0x78] sm:$0xff]
    %v39 = vld [vmem:[%s2 + $0x80] sm:$0xff]
    %v40 = vld [vmem:[%s2 + $0x88] sm:$0xff]
    %42 = vset.pattern.permute.xlu0 0
    %43 = vperm.xlu0 %42, %v37
    %v44 = vpop.permute.xlu0 %43
    %47 = vset.pattern.permute.xlu0 0
    %48 = vperm.xlu0 %47, %v38
    %v49 = vpop.permute.xlu0 %48
    %52 = vset.pattern.permute.xlu0 0
    %53 = vperm.xlu0 %52, %v39
    %v54 = vpop.permute.xlu0 %53
    %57 = vset.pattern.permute.xlu0 0
    %58 = vperm.xlu0 %57, %v40
    %v59 = vpop.permute.xlu0 %58
    %vm61 = vcmask 261120
    %v63 = vsel %vm61, %v23, 0
    %v66 = vsel %vm61, %v24, 0
    %v69 = vsel %vm61, %v25, 0
    %v72 = vsel %vm61, %v26, 0
    %74 = vmatprep.subr.mxu0 0.0
    %75 = vmatpush1.msra.mxu0 %v15
    %76 = vmatprep.subr.mxu0 0.0
    %77 = vmatpush1.msra.mxu0 %v16
    %78 = vmatprep.subr.mxu0 0.0
    %79 = vmatpush1.msra.mxu0 %v17
    %80 = vmatprep.subr.mxu0 0.0
    %81 = vmatpush1.msra.mxu0 %v18
    %82 = vmatprep.subr.mxu0 0.0
    %83 = vmatpush1.msra.mxu0 0.0
    %84 = vmatprep.subr.mxu0 0.0
    %85 = vmatpush1.msra.mxu0 0.0
    %86 = vmatprep.subr.mxu0 0.0
    %87 = vmatpush1.msra.mxu0 0.0
    %88 = vmatprep.subr.mxu0 0.0
    %89 = vmatpush1.msra.mxu0 0.0
    %90 = vmatprep.subr.mxu0 0.0
    %91 = vmatpush1.msra.mxu0 0.0
    %92 = vmatprep.subr.mxu0 0.0
    %93 = vmatpush1.msra.mxu0 0.0
    %94 = vmatprep.subr.mxu0 0.0
    %95 = vmatpush1.msra.mxu0 0.0
    %96 = vmatprep.subr.mxu0 0.0
    %97 = vmatpush1.msra.mxu0 0.0
    %98 = vmatprep.subr.mxu0 0.0
    %99 = vmatpush1.msra.mxu0 0.0
    %100 = vmatprep.subr.mxu0 0.0
    %101 = vmatpush1.msra.mxu0 0.0
    %102 = vmatprep.subr.mxu0 0.0
    %103 = vmatpush1.msra.mxu0 0.0
    %104 = vmatprep.subr.mxu0 0.0
    %105 = vmatpush1.msra.mxu0 0.0
    %106 = vmatprep.subr.mxu0 0.0
    %107 = vmatpush1.msra.mxu0 0.0
    %108 = vmatprep.subr.mxu0 0.0
    %109 = vmatpush1.msra.mxu0 0.0
    %110 = vmatprep.subr.mxu0 0.0
    %111 = vmatpush1.msra.mxu0 0.0
    %112 = vmatprep.subr.mxu0 0.0
    %113 = vmatpush1.msra.mxu0 0.0
    %114 = vmatprep.subr.mxu0 0.0
    %115 = vmatpush1.msra.mxu0 0.0
    %116 = vmatprep.subr.mxu0 0.0
    %117 = vmatpush1.msra.mxu0 0.0
    %118 = vmatprep.subr.mxu0 0.0
    %119 = vmatpush1.msra.mxu0 0.0
    %120 = vmatprep.subr.mxu0 0.0
    %121 = vmatpush1.msra.mxu0 0.0
    %122 = vmatprep.subr.mxu0 0.0
    %123 = vmatpush1.msra.mxu0 0.0
    %124 = vmatprep.subr.mxu0 0.0
    %125 = vmatpush1.msra.mxu0 0.0
    %126 = vmatprep.subr.mxu0 0.0
    %127 = vmatpush1.msra.mxu0 0.0
    %128 = vmatprep.subr.mxu0 0.0
    %129 = vmatpush1.msra.mxu0 0.0
    %130 = vmatprep.subr.mxu0 0.0
    %131 = vmatpush1.msra.mxu0 0.0
    %132 = vmatprep.subr.mxu0 0.0
    %133 = vmatpush1.msra.mxu0 0.0
    %134 = vmatprep.subr.mxu0 0.0
    %135 = vmatpush1.msra.mxu0 0.0
    %136 = vmatprep.subr.mxu0 0.0
    %137 = vmatpush1.msra.mxu0 0.0
    %138 = vmatprep.mubr.f32.mxu0 0.0
    %139 = vmatmul.mubr.f32.gmra.mrb[0].mxu0 %v63
    %v140 = vpop.f32.mrb[0].mxu0
    %v141 = vadd.f32 %v44, %v140
    %v142 = vpop.f32.mrb[0].mxu0
    %143 = vmatprep.mubr.f32.mxu0 0.0
    %144 = vmatmul.mubr.f32.gmra.mrb[0].mxu0 %v66
    %v145 = vpop.f32.mrb[0].mxu0
    %v146 = vadd.f32 %v49, %v145
    %v147 = vpop.f32.mrb[0].mxu0
    %148 = vmatprep.mubr.f32.mxu0 0.0
    %149 = vmatmul.mubr.f32.gmra.mrb[0].mxu0 %v69
    %v150 = vpop.f32.mrb[0].mxu0
    %v151 = vadd.f32 %v54, %v150
    %v152 = vpop.f32.mrb[0].mxu0
    %153 = vmatprep.mubr.f32.mxu0 0.0
    %154 = vmatmul.mubr.f32.gmra.mrb[0].mxu0 %v72
    %v155 = vpop.f32.mrb[0].mxu0
    %v156 = vadd.f32 %v59, %v155
    %v157 = vpop.f32.mrb[0].mxu0
    %158 = vdwg.mxu0
    %v159 = vmax.f32 %v141, 0.0
    %v160 = vmax.f32 %v146, 0.0
    %v161 = vmax.f32 %v151, 0.0
    %v162 = vmax.f32 %v156, 0.0
    %163 = vset.pattern.permute.xlu0 1
    %164 = vperm.xlu0 %163, %v37
    %v165 = vpop.permute.xlu0 %164
    %167 = vset.pattern.permute.xlu0 1
    %168 = vperm.xlu0 %167, %v38
    %v169 = vpop.permute.xlu0 %168
    %171 = vset.pattern.permute.xlu0 1
    %172 = vperm.xlu0 %171, %v39
    %v173 = vpop.permute.xlu0 %172
    %175 = vset.pattern.permute.xlu0 1
    %176 = vperm.xlu0 %175, %v40
    %v177 = vpop.permute.xlu0 %176
    %v180 = vsel %vm61, %v27, 0
    %v183 = vsel %vm61, %v28, 0
    %v186 = vsel %vm61, %v29, 0
    %v189 = vsel %vm61, %v30, 0
    %191 = vmatprep.subr.mxu0 0.0
    %192 = vmatpush1.msra.mxu0 %v159
    %193 = vmatprep.subr.mxu0 0.0
    %194 = vmatpush1.msra.mxu0 %v160
    %195 = vmatprep.subr.mxu0 0.0
    %196 = vmatpush1.msra.mxu0 %v161
    %197 = vmatprep.subr.mxu0 0.0
    %198 = vmatpush1.msra.mxu0 %v162
    %199 = vmatprep.subr.mxu0 0.0
    %200 = vmatpush1.msra.mxu0 0.0
    %201 = vmatprep.subr.mxu0 0.0
    %202 = vmatpush1.msra.mxu0 0.0
    %203 = vmatprep.subr.mxu0 0.0
    %204 = vmatpush1.msra.mxu0 0.0
    %205 = vmatprep.subr.mxu0 0.0
    %206 = vmatpush1.msra.mxu0 0.0
    %207 = vmatprep.subr.mxu0 0.0
    %208 = vmatpush1.msra.mxu0 0.0
    %209 = vmatprep.subr.mxu0 0.0
    %210 = vmatpush1.msra.mxu0 0.0
    %211 = vmatprep.subr.mxu0 0.0
    %212 = vmatpush1.msra.mxu0 0.0
    %213 = vmatprep.subr.mxu0 0.0
    %214 = vmatpush1.msra.mxu0 0.0
    %215 = vmatprep.subr.mxu0 0.0
    %216 = vmatpush1.msra.mxu0 0.0
    %217 = vmatprep.subr.mxu0 0.0
    %218 = vmatpush1.msra.mxu0 0.0
    %219 = vmatprep.subr.mxu0 0.0
    %220 = vmatpush1.msra.mxu0 0.0
    %221 = vmatprep.subr.mxu0 0.0
    %222 = vmatpush1.msra.mxu0 0.0
    %223 = vmatprep.subr.mxu0 0.0
    %224 = vmatpush1.msra.mxu0 0.0
    %225 = vmatprep.subr.mxu0 0.0
    %226 = vmatpush1.msra.mxu0 0.0
    %227 = vmatprep.subr.mxu0 0.0
    %228 = vmatpush1.msra.mxu0 0.0
    %229 = vmatprep.subr.mxu0 0.0
    %230 = vmatpush1.msra.mxu0 0.0
    %231 = vmatprep.subr.mxu0 0.0
    %232 = vmatpush1.msra.mxu0 0.0
    %233 = vmatprep.subr.mxu0 0.0
    %234 = vmatpush1.msra.mxu0 0.0
    %235 = vmatprep.subr.mxu0 0.0
    %236 = vmatpush1.msra.mxu0 0.0
    %237 = vmatprep.subr.mxu0 0.0
    %238 = vmatpush1.msra.mxu0 0.0
    %239 = vmatprep.subr.mxu0 0.0
    %240 = vmatpush1.msra.mxu0 0.0
    %241 = vmatprep.subr.mxu0 0.0
    %242 = vmatpush1.msra.mxu0 0.0
    %243 = vmatprep.subr.mxu0 0.0
    %244 = vmatpush1.msra.mxu0 0.0
    %245 = vmatprep.subr.mxu0 0.0
    %246 = vmatpush1.msra.mxu0 0.0
    %247 = vmatprep.subr.mxu0 0.0
    %248 = vmatpush1.msra.mxu0 0.0
    %249 = vmatprep.subr.mxu0 0.0
    %250 = vmatpush1.msra.mxu0 0.0
    %251 = vmatprep.subr.mxu0 0.0
    %252 = vmatpush1.msra.mxu0 0.0
    %253 = vmatprep.subr.mxu0 0.0
    %254 = vmatpush1.msra.mxu0 0.0
    %255 = vmatprep.mubr.f32.mxu0 0.0
    %256 = vmatmul.mubr.f32.gmra.mrb[0].mxu0 %v180
    %v257 = vpop.f32.mrb[0].mxu0
    %v258 = vadd.f32 %v165, %v257
    %v259 = vpop.f32.mrb[0].mxu0
    %260 = vmatprep.mubr.f32.mxu0 0.0
    %261 = vmatmul.mubr.f32.gmra.mrb[0].mxu0 %v183
    %v262 = vpop.f32.mrb[0].mxu0
    %v263 = vadd.f32 %v169, %v262
    %v264 = vpop.f32.mrb[0].mxu0
    %265 = vmatprep.mubr.f32.mxu0 0.0
    %266 = vmatmul.mubr.f32.gmra.mrb[0].mxu0 %v186
    %v267 = vpop.f32.mrb[0].mxu0
    %v268 = vadd.f32 %v173, %v267
    %v269 = vpop.f32.mrb[0].mxu0
    %270 = vmatprep.mubr.f32.mxu0 0.0
    %271 = vmatmul.mubr.f32.gmra.mrb[0].mxu0 %v189
    %v272 = vpop.f32.mrb[0].mxu0
    %v273 = vadd.f32 %v177, %v272
    %v274 = vpop.f32.mrb[0].mxu0
    %275 = vdwg.mxu0
    %276 = vset.pattern.permute.xlu0 2
    %277 = vperm.xlu0 %276, %v37
    %v278 = vpop.permute.xlu0 %277
    %280 = vset.pattern.permute.xlu0 2
    %281 = vperm.xlu0 %280, %v38
    %v282 = vpop.permute.xlu0 %281
    %284 = vset.pattern.permute.xlu0 2
    %285 = vperm.xlu0 %284, %v39
    %v286 = vpop.permute.xlu0 %285
    %288 = vset.pattern.permute.xlu0 2
    %289 = vperm.xlu0 %288, %v40
    %v290 = vpop.permute.xlu0 %289
    %v293 = vsel %vm61, %v31, 0
    %v296 = vsel %vm61, %v32, 0
    %v299 = vsel %vm61, %v33, 0
    %v302 = vsel %vm61, %v34, 0
    %304 = vmatprep.subr.mxu0 0.0
    %305 = vmatpush1.msra.mxu0 %v258
    %306 = vmatprep.subr.mxu0 0.0
    %307 = vmatpush1.msra.mxu0 %v263
    %308 = vmatprep.subr.mxu0 0.0
    %309 = vmatpush1.msra.mxu0 %v268
    %310 = vmatprep.subr.mxu0 0.0
    %311 = vmatpush1.msra.mxu0 %v273
    %312 = vmatprep.subr.mxu0 0.0
    %313 = vmatpush1.msra.mxu0 0.0
    %314 = vmatprep.subr.mxu0 0.0
    %315 = vmatpush1.msra.mxu0 0.0
    %316 = vmatprep.subr.mxu0 0.0
    %317 = vmatpush1.msra.mxu0 0.0
    %318 = vmatprep.subr.mxu0 0.0
    %319 = vmatpush1.msra.mxu0 0.0
    %320 = vmatprep.subr.mxu0 0.0
    %321 = vmatpush1.msra.mxu0 0.0
    %322 = vmatprep.subr.mxu0 0.0
    %323 = vmatpush1.msra.mxu0 0.0
    %324 = vmatprep.subr.mxu0 0.0
    %325 = vmatpush1.msra.mxu0 0.0
    %326 = vmatprep.subr.mxu0 0.0
    %327 = vmatpush1.msra.mxu0 0.0
    %328 = vmatprep.subr.mxu0 0.0
    %329 = vmatpush1.msra.mxu0 0.0
    %330 = vmatprep.subr.mxu0 0.0
    %331 = vmatpush1.msra.mxu0 0.0
    %332 = vmatprep.subr.mxu0 0.0
    %333 = vmatpush1.msra.mxu0 0.0
    %334 = vmatprep.subr.mxu0 0.0
    %335 = vmatpush1.msra.mxu0 0.0
    %336 = vmatprep.subr.mxu0 0.0
    %337 = vmatpush1.msra.mxu0 0.0
    %338 = vmatprep.subr.mxu0 0.0
    %339 = vmatpush1.msra.mxu0 0.0
    %340 = vmatprep.subr.mxu0 0.0
    %341 = vmatpush1.msra.mxu0 0.0
    %342 = vmatprep.subr.mxu0 0.0
    %343 = vmatpush1.msra.mxu0 0.0
    %344 = vmatprep.subr.mxu0 0.0
    %345 = vmatpush1.msra.mxu0 0.0
    %346 = vmatprep.subr.mxu0 0.0
    %347 = vmatpush1.msra.mxu0 0.0
    %348 = vmatprep.subr.mxu0 0.0
    %349 = vmatpush1.msra.mxu0 0.0
    %350 = vmatprep.subr.mxu0 0.0
    %351 = vmatpush1.msra.mxu0 0.0
    %352 = vmatprep.subr.mxu0 0.0
    %353 = vmatpush1.msra.mxu0 0.0
    %354 = vmatprep.subr.mxu0 0.0
    %355 = vmatpush1.msra.mxu0 0.0
    %356 = vmatprep.subr.mxu0 0.0
    %357 = vmatpush1.msra.mxu0 0.0
    %358 = vmatprep.subr.mxu0 0.0
    %359 = vmatpush1.msra.mxu0 0.0
    %360 = vmatprep.subr.mxu0 0.0
    %361 = vmatpush1.msra.mxu0 0.0
    %362 = vmatprep.subr.mxu0 0.0
    %363 = vmatpush1.msra.mxu0 0.0
    %364 = vmatprep.subr.mxu0 0.0
    %365 = vmatpush1.msra.mxu0 0.0
    %366 = vmatprep.subr.mxu0 0.0
    %367 = vmatpush1.msra.mxu0 0.0
    %368 = vmatprep.mubr.f32.mxu0 0.0
    %369 = vmatmul.mubr.f32.gmra.mrb[0].mxu0 %v293
    %v370 = vpop.f32.mrb[0].mxu0
    %v371 = vadd.f32 %v278, %v370
    %v372 = vpop.f32.mrb[0].mxu0
    %373 = vmatprep.mubr.f32.mxu0 0.0
    %374 = vmatmul.mubr.f32.gmra.mrb[0].mxu0 %v296
    %v375 = vpop.f32.mrb[0].mxu0
    %v376 = vadd.f32 %v282, %v375
    %v377 = vpop.f32.mrb[0].mxu0
    %378 = vmatprep.mubr.f32.mxu0 0.0
    %379 = vmatmul.mubr.f32.gmra.mrb[0].mxu0 %v299
    %v380 = vpop.f32.mrb[0].mxu0
    %v381 = vadd.f32 %v286, %v380
    %v382 = vpop.f32.mrb[0].mxu0
    %383 = vmatprep.mubr.f32.mxu0 0.0
    %384 = vmatmul.mubr.f32.gmra.mrb[0].mxu0 %v302
    %v385 = vpop.f32.mrb[0].mxu0
    %v386 = vadd.f32 %v290, %v385
    %v387 = vpop.f32.mrb[0].mxu0
    %388 = vdwg.mxu0
    %v389 = vmax.f32 %v371, 0.0
    %v390 = vmax.f32 %v376, 0.0
    %v391 = vmax.f32 %v381, 0.0
    %v392 = vmax.f32 %v386, 0.0
    %393 = vmatprep.subr.mxu0 0.0
    %394 = vmatpush1.msra.mxu0 %v19
    %395 = vmatprep.subr.mxu0 0.0
    %396 = vmatpush1.msra.mxu0 %v20
    %397 = vmatprep.subr.mxu0 0.0
    %398 = vmatpush1.msra.mxu0 %v21
    %399 = vmatprep.subr.mxu0 0.0
    %400 = vmatpush1.msra.mxu0 %v22
    %401 = vmatprep.subr.mxu0 0.0
    %402 = vmatpush1.msra.mxu0 0.0
    %403 = vmatprep.subr.mxu0 0.0
    %404 = vmatpush1.msra.mxu0 0.0
    %405 = vmatprep.subr.mxu0 0.0
    %406 = vmatpush1.msra.mxu0 0.0
    %407 = vmatprep.subr.mxu0 0.0
    %408 = vmatpush1.msra.mxu0 0.0
    %409 = vmatprep.subr.mxu0 0.0
    %410 = vmatpush1.msra.mxu0 0.0
    %411 = vmatprep.subr.mxu0 0.0
    %412 = vmatpush1.msra.mxu0 0.0
    %413 = vmatprep.subr.mxu0 0.0
    %414 = vmatpush1.msra.mxu0 0.0
    %415 = vmatprep.subr.mxu0 0.0
    %416 = vmatpush1.msra.mxu0 0.0
    %417 = vmatprep.subr.mxu0 0.0
    %418 = vmatpush1.msra.mxu0 0.0
    %419 = vmatprep.subr.mxu0 0.0
    %420 = vmatpush1.msra.mxu0 0.0
    %421 = vmatprep.subr.mxu0 0.0
    %422 = vmatpush1.msra.mxu0 0.0
    %423 = vmatprep.subr.mxu0 0.0
    %424 = vmatpush1.msra.mxu0 0.0
    %425 = vmatprep.subr.mxu0 0.0
    %426 = vmatpush1.msra.mxu0 0.0
    %427 = vmatprep.subr.mxu0 0.0
    %428 = vmatpush1.msra.mxu0 0.0
    %429 = vmatprep.subr.mxu0 0.0
    %430 = vmatpush1.msra.mxu0 0.0
    %431 = vmatprep.subr.mxu0 0.0
    %432 = vmatpush1.msra.mxu0 0.0
    %433 = vmatprep.subr.mxu0 0.0
    %434 = vmatpush1.msra.mxu0 0.0
    %435 = vmatprep.subr.mxu0 0.0
    %436 = vmatpush1.msra.mxu0 0.0
    %437 = vmatprep.subr.mxu0 0.0
    %438 = vmatpush1.msra.mxu0 0.0
    %439 = vmatprep.subr.mxu0 0.0
    %440 = vmatpush1.msra.mxu0 0.0
    %441 = vmatprep.subr.mxu0 0.0
    %442 = vmatpush1.msra.mxu0 0.0
    %443 = vmatprep.subr.mxu0 0.0
    %444 = vmatpush1.msra.mxu0 0.0
    %445 = vmatprep.subr.mxu0 0.0
    %446 = vmatpush1.msra.mxu0 0.0
    %447 = vmatprep.subr.mxu0 0.0
    %448 = vmatpush1.msra.mxu0 0.0
    %449 = vmatprep.subr.mxu0 0.0
    %450 = vmatpush1.msra.mxu0 0.0
    %451 = vmatprep.subr.mxu0 0.0
    %452 = vmatpush1.msra.mxu0 0.0
    %453 = vmatprep.subr.mxu0 0.0
    %454 = vmatpush1.msra.mxu0 0.0
    %455 = vmatprep.subr.mxu0 0.0
    %456 = vmatpush1.msra.mxu0 0.0
    %457 = vmatprep.mubr.f32.mxu0 0.0
    %458 = vmatmul.mubr.f32.gmra.mrb[0].mxu0 %v293
    %v459 = vpop.f32.mrb[0].mxu0
    %v460 = vadd.f32 %v278, %v459
    %v461 = vpop.f32.mrb[0].mxu0
    %462 = vmatprep.mubr.f32.mxu0 0.0
    %463 = vmatmul.mubr.f32.gmra.mrb[0].mxu0 %v296
    %v464 = vpop.f32.mrb[0].mxu0
    %v465 = vadd.f32 %v282, %v464
    %v466 = vpop.f32.mrb[0].mxu0
    %467 = vmatprep.mubr.f32.mxu0 0.0
    %468 = vmatmul.mubr.f32.gmra.mrb[0].mxu0 %v299
    %v469 = vpop.f32.mrb[0].mxu0
    %v470 = vadd.f32 %v286, %v469
    %v471 = vpop.f32.mrb[0].mxu0
    %472 = vmatprep.mubr.f32.mxu0 0.0
    %473 = vmatmul.mubr.f32.gmra.mrb[0].mxu0 %v302
    %v474 = vpop.f32.mrb[0].mxu0
    %v475 = vadd.f32 %v290, %v474
    %v476 = vpop.f32.mrb[0].mxu0
    %477 = vdwg.mxu0
    %v478 = vmax.f32 %v460, 0.0
    %v479 = vmax.f32 %v465, 0.0
    %v480 = vmax.f32 %v470, 0.0
    %v481 = vmax.f32 %v475, 0.0
    %v482 = vsub.f32 %v389, %v478
    %v483 = vsub.f32 %v390, %v479
    %v484 = vsub.f32 %v391, %v480
    %v485 = vsub.f32 %v392, %v481
    %v487 = vsel %vm61, %v35, 0
    %v490 = vsel %vm61, %v36, 0
    %492 = vmatprep.subr.mxu0 0.0
    %493 = vmatpush1.msra.mxu0 %v482
    %494 = vmatprep.subr.mxu0 0.0
    %495 = vmatpush1.msra.mxu0 %v483
    %496 = vmatprep.subr.mxu0 0.0
    %497 = vmatpush1.msra.mxu0 %v484
    %498 = vmatprep.subr.mxu0 0.0
    %499 = vmatpush1.msra.mxu0 %v485
    %500 = vmatprep.subr.mxu0 0.0
    %501 = vmatpush1.msra.mxu0 0.0
    %502 = vmatprep.subr.mxu0 0.0
    %503 = vmatpush1.msra.mxu0 0.0
    %504 = vmatprep.subr.mxu0 0.0
    %505 = vmatpush1.msra.mxu0 0.0
    %506 = vmatprep.subr.mxu0 0.0
    %507 = vmatpush1.msra.mxu0 0.0
    %508 = vmatprep.subr.mxu0 0.0
    %509 = vmatpush1.msra.mxu0 0.0
    %510 = vmatprep.subr.mxu0 0.0
    %511 = vmatpush1.msra.mxu0 0.0
    %512 = vmatprep.subr.mxu0 0.0
    %513 = vmatpush1.msra.mxu0 0.0
    %514 = vmatprep.subr.mxu0 0.0
    %515 = vmatpush1.msra.mxu0 0.0
    %516 = vmatprep.subr.mxu0 0.0
    %517 = vmatpush1.msra.mxu0 0.0
    %518 = vmatprep.subr.mxu0 0.0
    %519 = vmatpush1.msra.mxu0 0.0
    %520 = vmatprep.subr.mxu0 0.0
    %521 = vmatpush1.msra.mxu0 0.0
    %522 = vmatprep.subr.mxu0 0.0
    %523 = vmatpush1.msra.mxu0 0.0
    %524 = vmatprep.subr.mxu0 0.0
    %525 = vmatpush1.msra.mxu0 0.0
    %526 = vmatprep.subr.mxu0 0.0
    %527 = vmatpush1.msra.mxu0 0.0
    %528 = vmatprep.subr.mxu0 0.0
    %529 = vmatpush1.msra.mxu0 0.0
    %530 = vmatprep.subr.mxu0 0.0
    %531 = vmatpush1.msra.mxu0 0.0
    %532 = vmatprep.subr.mxu0 0.0
    %533 = vmatpush1.msra.mxu0 0.0
    %534 = vmatprep.subr.mxu0 0.0
    %535 = vmatpush1.msra.mxu0 0.0
    %536 = vmatprep.subr.mxu0 0.0
    %537 = vmatpush1.msra.mxu0 0.0
    %538 = vmatprep.subr.mxu0 0.0
    %539 = vmatpush1.msra.mxu0 0.0
    %540 = vmatprep.subr.mxu0 0.0
    %541 = vmatpush1.msra.mxu0 0.0
    %542 = vmatprep.subr.mxu0 0.0
    %543 = vmatpush1.msra.mxu0 0.0
    %544 = vmatprep.subr.mxu0 0.0
    %545 = vmatpush1.msra.mxu0 0.0
    %546 = vmatprep.subr.mxu0 0.0
    %547 = vmatpush1.msra.mxu0 0.0
    %548 = vmatprep.subr.mxu0 0.0
    %549 = vmatpush1.msra.mxu0 0.0
    %550 = vmatprep.subr.mxu0 0.0
    %551 = vmatpush1.msra.mxu0 0.0
    %552 = vmatprep.subr.mxu0 0.0
    %553 = vmatpush1.msra.mxu0 0.0
    %554 = vmatprep.subr.mxu0 0.0
    %555 = vmatpush1.msra.mxu0 0.0
    %556 = vmatprep.mubr.f32.mxu0 0.0
    %557 = vmatmul.mubr.f32.gmra.mrb[0].mxu0 %v487
    %v558 = vpop.f32.mrb[0].mxu0
    %v559 = vadd.f32 0.0, %v558
    %v560 = vpop.f32.mrb[0].mxu0
    %561 = vmatprep.mubr.f32.mxu0 0.0
    %562 = vmatmul.mubr.f32.gmra.mrb[0].mxu0 %v490
    %v563 = vpop.f32.mrb[0].mxu0
    %v564 = vadd.f32 0.0, %v563
    %v565 = vpop.f32.mrb[0].mxu0
    %566 = vdwg.mxu0
    %v567 = vmul.f32 %v559, %v559
    %v568 = vmul.f32 %v564, %v564
    %vm569 = vcmask 130048
    %v570 = vsel %vm569, %v567, 0.0
    %v571 = vsel %vm569, %v568, 0.0
    %v572 = vadd.f32 %v570, %v571
    %v573 = vrot.slane %v572, 4
    %v574 = vadd.f32 %v572, %v573
    %v575 = vrot.slane %v574, 2
    %v576 = vadd.f32 %v574, %v575
    %v577 = vrot.slane %v576, 1
    %v578 = vadd.f32 %v576, %v577
    %vm579 = vcmask 122880
    %580 = vst.msk [vmem:[#allocation2] sm:$0x1] %vm579, %v578
    // Predicated region
    $region14: #{tpu_custom_call.1} parent=1 // pred_check
      _
    $region15: #{tpu_custom_call.1} parent=1 // pred_check_branch
      %582 = sbr.rel (0) target = $region17
    $region16: #{tpu_custom_call.1} parent=1 // pred_region
      %s584 = ssub.s32 16, 16
      %585 = vsyncadd [#allocation3], %s584
      %s587 = sshll.u32 [#allocation2], 4
      %s588 = int_to_ptr.vmem [resolvable:$true] %s587
      %590 = dma.vmem_to_hbm [thread:$0]  %s588, 16, %s3, [#allocation3]
    $region17: #{tpu_custom_call.1} parent=1 // pred_fallthru
      _
    // Predicated region
    $region18: #{tpu_custom_call.1} parent=1 // pred_check
      _
    $region19: #{tpu_custom_call.1} parent=1 // pred_check_branch
      %592 = sbr.rel (0) target = $region21
    $region20: #{tpu_custom_call.1} parent=1 // pred_region
      %593 = dma.done [#allocation3], 16
    $region21: #{tpu_custom_call.1} parent=1 // pred_fallthru
      _
    %594 = vsyncpa [#allocation3], 1

</llo_original>
